<compile_context>
chip_gen: v5e
topology: v5e:2x2
jax: 0.10.0
libtpu: 0.0.40
codegen_flags: <defaults>
</compile_context>

<pallas_src>
import functools

import jax
import jax.numpy as jnp
from jax import lax
from jax.experimental import pallas as pl
from jax.experimental.pallas import tpu as pltpu

LANES = 128      # lane-dense width
PRED_LANE = 3    # output lane carrying the decoded tag index (as a float 0./1./2.)


def bilstm_crf_kernel(x_ref, const_ref, out_ref, hid_ref, *, E, H2):
    """Fused BiLSTM -> hidden2tag -> length-1-Viterbi decode for ONE sentence.

    x_ref:     (T, 2E)        per-time [x[t] | x[T-1-t]] (reverse precomputed in glue)
    const_ref: (2E+2H+8, 128) packed weight slab (see build_fused_params)
    out_ref:   (T, 128)       lanes 0:3 = emissions, lane PRED_LANE = decoded tag
    hid_ref:   (T, 2*H2)      VMEM scratch holding the per-time BiLSTM hidden rows
    """
    T = x_ref.shape[0]
    H = 2 * H2
    G = 8 * H2          # fused gate width (= LANES for H2=16)
    W = 2 * H2          # per-gate fused width (fwd|bwd)

    # ---- unpack the single packed constant slab (all slices 8-row aligned) ----
    wih = const_ref[0:2 * E, :]                            # (2E, G) input->gates, both dirs
    whh = const_ref[2 * E:2 * E + H, :]                    # (H, G) block-diag recurrent
    wtag = const_ref[2 * E + H:2 * E + 2 * H, :]           # (H, 128) hidden2tag (cols 0:3)
    vecs = const_ref[2 * E + 2 * H:2 * E + 2 * H + 8, :]   # (8, 128)
    b_all = vecs[0:1, :]     # fused gate biases (b_ih + b_hh, both dirs)
    btag = vecs[1:2, :]      # tag bias (cols 0:3)
    se = vecs[2:3, :]        # start_transitions + end_transitions (cols 0:3)

    # ---- hoisted input projection: one (T,2E)x(2E,G) MXU matmul for both directions ----
    gate_x = jnp.dot(x_ref[...], wih, preferred_element_type=jnp.float32) + b_all  # (T, G)

    # ---- fused, fully-unrolled recurrence ----
    # Step s advances the forward direction at time s and the backward direction at
    # time T-1-s with ONE (1,H)x(H,G) recurrent matmul; gate slot layout is
    # [i_f i_b | f_f f_b | g_f g_b | o_f o_b] so one sigmoid + one tanh cover everything.
    h = jnp.zeros((1, H), jnp.float32)   # [h_fwd | h_bwd]
    c = jnp.zeros((1, H), jnp.float32)
    for s in range(T):
        gates = gate_x[s:s + 1, :] + jnp.dot(h, whh, preferred_element_type=jnp.float32)
        sig = jax.nn.sigmoid(gates)      # one EUP launch over the full 128-lane vreg
        tnh = jnp.tanh(gates)            # one EUP launch covering the g slot
        i_g = sig[:, 0 * W:1 * W]
        f_g = sig[:, 1 * W:2 * W]
        g_g = tnh[:, 2 * W:3 * W]
        o_g = sig[:, 3 * W:4 * W]
        c = f_g * c + i_g * g_g
        h = o_g * jnp.tanh(c)
        hid_ref[s:s + 1, 0:H2] = h[:, 0:H2]            # forward output for time s
        hid_ref[T - 1 - s:T - s, H2:H] = h[:, H2:H]    # backward output for time T-1-s

    lstm_out = hid_ref[...]                            # (T, H)

    # ---- hidden2tag (lane-dense: wtag padded to 128 cols, cols 0:3 valid) ----
    emis_full = jnp.dot(lstm_out, wtag, preferred_element_type=jnp.float32) + btag  # (T,128)

    # ---- CRF decode: length-1 Viterbi == per-token argmax (first-max wins) ----
    score = emis_full + se
    s0 = score[:, 0:1]
    s1 = score[:, 1:2]
    s2 = score[:, 2:3]
    best = jnp.where(s2 > jnp.maximum(s0, s1), 2.0,
                     jnp.where(s1 > s0, 1.0, 0.0))     # (T,1) float tag index

    # ---- fuse emissions + prediction into one lane-dense output slab ----
    lane = lax.broadcasted_iota(jnp.int32, (T, LANES), 1)
    out_ref[...] = jnp.where(lane == PRED_LANE,
                             jnp.broadcast_to(best, (T, LANES)),
                             emis_full)


def build_fused_params(raw):
    """Pack PyTorch-layout weights into one lane-dense constant slab for the kernel."""
    H2 = raw["w_hh_f"].shape[1]
    E = raw["w_ih_f"].shape[1]
    H = 2 * H2
    G = 8 * H2
    assert G <= LANES, "fused gate width must fit in one 128-lane vreg"

    bf = raw["b_ih_f"] + raw["b_hh_f"]
    bb = raw["b_ih_b"] + raw["b_hh_b"]

    wih = jnp.zeros((2 * E, G), jnp.float32)   # rows 0:E fwd x, rows E:2E reversed x
    whh = jnp.zeros((H, G), jnp.float32)       # block-diagonal fused recurrent weight
    b_all = jnp.zeros((G,), jnp.float32)
    for gi in range(4):                        # PyTorch gate order: i, f, g, o
        r0, r1 = gi * H2, (gi + 1) * H2
        cf = gi * 2 * H2                       # fused fwd slot start
        cb = cf + H2                           # fused bwd slot start
        wih = wih.at[0:E, cf:cf + H2].set(raw["w_ih_f"][r0:r1, :].T)
        wih = wih.at[E:2 * E, cb:cb + H2].set(raw["w_ih_b"][r0:r1, :].T)
        whh = whh.at[0:H2, cf:cf + H2].set(raw["w_hh_f"][r0:r1, :].T)
        whh = whh.at[H2:H, cb:cb + H2].set(raw["w_hh_b"][r0:r1, :].T)
        b_all = b_all.at[cf:cf + H2].set(bf[r0:r1])
        b_all = b_all.at[cb:cb + H2].set(bb[r0:r1])

    rows = 2 * E + 2 * H + 8                   # 136 for E=32, H2=16 (multiple of 8)
    const = jnp.zeros((rows, LANES), jnp.float32)
    const = const.at[0:2 * E, 0:G].set(wih)
    const = const.at[2 * E:2 * E + H, 0:G].set(whh)
    const = const.at[2 * E + H:2 * E + 2 * H, 0:3].set(raw["w_tag"].T)
    const = const.at[2 * E + 2 * H, 0:G].set(b_all)
    const = const.at[2 * E + 2 * H + 1, 0:3].set(raw["b_tag"])
    const = const.at[2 * E + 2 * H + 2, 0:3].set(raw["start"] + raw["end"])
    return const


def bilstm_crf_forward(xs, const_slab, *, E, H2):
    """xs: (B, T, E) batch of equal-length sentences -> (emissions (B,T,3), pred (B,T))."""
    B, T, _ = xs.shape
    # Reverse is free glue; the kernel's hoisted matmul wants [x[t] | x[T-1-t]] rows.
    x_cat = jnp.concatenate([xs, xs[:, ::-1, :]], axis=-1)          # (B, T, 2E)
    rows = const_slab.shape[0]
    kernel = functools.partial(bilstm_crf_kernel, E=E, H2=H2)
    out = pl.pallas_call(
        kernel,
        out_shape=jax.ShapeDtypeStruct((B, T, LANES), jnp.float32),
        grid_spec=pltpu.PrefetchScalarGridSpec(
            num_scalar_prefetch=0,
            grid=(B,),
            in_specs=[
                pl.BlockSpec((pl.Squeezed(), T, 2 * E), lambda b: (b, 0, 0)),
                pl.BlockSpec((rows, LANES), lambda b: (0, 0)),      # resident weights
            ],
            out_specs=pl.BlockSpec((pl.Squeezed(), T, LANES), lambda b: (b, 0, 0)),
            scratch_shapes=[pltpu.VMEM((T, 2 * H2), jnp.float32)],
        ),
        compiler_params=pltpu.CompilerParams(dimension_semantics=("parallel",)),
    )(x_cat, const_slab)
    emissions = out[:, :, 0:3]
    pred = out[:, :, PRED_LANE].astype(jnp.int32)
    return emissions, pred


def ref_forward(x, raw):
    """Pure-JAX reference with the original (unfused) math, for correctness check."""
    H2 = raw["w_hh_f"].shape[1]

    def run_dir(xs, w_ih, w_hh, b_ih, b_hh):
        wih, whh, b = w_ih.T, w_hh.T, (b_ih + b_hh)[None, :]

        def step(carry, x_t):
            h, c = carry
            g = x_t[None, :] @ wih + h @ whh + b
            i = jax.nn.sigmoid(g[:, 0 * H2:1 * H2])
            f = jax.nn.sigmoid(g[:, 1 * H2:2 * H2])
            gg = jnp.tanh(g[:, 2 * H2:3 * H2])
            o = jax.nn.sigmoid(g[:, 3 * H2:4 * H2])
            c = f * c + i * gg
            h = o * jnp.tanh(c)
            return (h, c), h[0]

        h0 = jnp.zeros((1, H2), jnp.float32)
        c0 = jnp.zeros((1, H2), jnp.float32)
        _, hs = lax.scan(step, (h0, c0), xs)
        return hs

    hf = run_dir(x, raw["w_ih_f"], raw["w_hh_f"], raw["b_ih_f"], raw["b_hh_f"])
    hb = run_dir(x[::-1], raw["w_ih_b"], raw["w_hh_b"], raw["b_ih_b"], raw["b_hh_b"])[::-1]
    lstm_out = jnp.concatenate([hf, hb], axis=-1)
    emissions = lstm_out @ raw["w_tag"].T + raw["b_tag"]
    score = emissions + raw["start"] + raw["end"]
    pred = jnp.argmax(score, axis=-1).astype(jnp.int32)
    return emissions, pred


if __name__ == "__main__":
    # Small shapes consistent with the module: seq_len=8, embedding_dim=32, hidden_dim=32;
    # batch of 4 equal-length sentences processed over the grid axis.
    B, T, E, H = 4, 8, 32, 32
    H2 = H // 2
    idx_to_tag = {0: "B", 1: "I", 2: "O"}

    key = jax.random.PRNGKey(0)
    ks = jax.random.split(key, 13)

    def u(k, shape, scale):
        return jax.random.uniform(k, shape, jnp.float32, -scale, scale)

    k_lstm = 1.0 / float(H2) ** 0.5
    k_lin = 1.0 / float(H) ** 0.5

    # PyTorch-layout parameters (deterministic init; no checkpoint loading).
    raw = dict(
        w_ih_f=u(ks[0], (4 * H2, E), k_lstm),
        w_hh_f=u(ks[1], (4 * H2, H2), k_lstm),
        b_ih_f=u(ks[2], (4 * H2,), k_lstm),
        b_hh_f=u(ks[3], (4 * H2,), k_lstm),
        w_ih_b=u(ks[4], (4 * H2, E), k_lstm),
        w_hh_b=u(ks[5], (4 * H2, H2), k_lstm),
        b_ih_b=u(ks[6], (4 * H2,), k_lstm),
        b_hh_b=u(ks[7], (4 * H2,), k_lstm),
        w_tag=u(ks[8], (3, H), k_lin),
        b_tag=u(ks[9], (3,), k_lin),
        start=u(ks[10], (3,), 0.1),
        end=u(ks[11], (3,), 0.1),
    )
    # TODO(synk): CRF transition matrix (3,3) is mathematically unused for the length-1
    # Viterbi decode that the original forward performs, so it is not fed to the kernel.

    const_slab = build_fused_params(raw)

    # "sentence" inputs: (B, T, E) word embeddings (equal-length sentences).
    xs = jax.random.normal(ks[12], (B, T, E), jnp.float32)

    emis, pred = bilstm_crf_forward(xs, const_slab, E=E, H2=H2)
    emis = jax.block_until_ready(emis)
    pred = jax.block_until_ready(pred)

    emis_gold, pred_gold = [], []
    for b in range(B):
        eg, pg = ref_forward(xs[b], raw)
        emis_gold.append(eg)
        pred_gold.append(pg)
    emis_gold = jnp.stack(emis_gold)
    pred_gold = jnp.stack(pred_gold)

    assert jnp.allclose(emis, emis_gold, rtol=1e-4, atol=1e-4), "emission mismatch"
    assert bool(jnp.all(pred == pred_gold)), "decode mismatch"

    # Same output contract as the module, per sentence (host glue).
    pred_tags = [[idx_to_tag[int(i)] for i in row] for row in pred]
    assert len(pred_tags) == B and all(len(r) == T for r in pred_tags)

    print("KERNEL_OK")
</pallas_src>

<mosaic_0001>
module attributes {stable_mosaic.version = 11 : i64} {
  func.func @bilstm_crf_kernel(%arg0: i32, %arg1: memref<1x8x64xf32, #tpu.memory_space<vmem>>, %arg2: memref<136x128xf32, #tpu.memory_space<vmem>>, %arg3: memref<1x8x128xf32, #tpu.memory_space<vmem>>, %arg4: memref<8x32xf32, #tpu.memory_space<vmem>>) attributes {dimension_semantics = [#tpu.dimension_semantics<parallel>], iteration_bounds = array<i64: 4>, scalar_prefetch = 0 : i64, scratch_operands = 1 : i64, tpu.core_type = #tpu.core_type<tc>, window_params = [{transform_indices = @transform_0, window_bounds = array<i64: 1, 8, 64>}, {pipeline_mode = #tpu.pipeline_mode<synchronous>, transform_indices = @transform_1, window_bounds = array<i64: 136, 128>}, {transform_indices = @transform_2, window_bounds = array<i64: 1, 8, 128>}]} {
    %c0 = arith.constant 0 : index
    %c0_0 = arith.constant 0 : index
    %0 = vector.load %arg2[%c0, %c0_0] : memref<136x128xf32, #tpu.memory_space<vmem>>, vector<64x128xf32>
    %c64 = arith.constant 64 : index
    %c0_1 = arith.constant 0 : index
    %1 = vector.load %arg2[%c64, %c0_1] : memref<136x128xf32, #tpu.memory_space<vmem>>, vector<32x128xf32>
    %c96 = arith.constant 96 : index
    %c0_2 = arith.constant 0 : index
    %2 = vector.load %arg2[%c96, %c0_2] : memref<136x128xf32, #tpu.memory_space<vmem>>, vector<32x128xf32>
    %c128 = arith.constant 128 : index
    %c0_3 = arith.constant 0 : index
    %3 = vector.load %arg2[%c128, %c0_3] : memref<136x128xf32, #tpu.memory_space<vmem>>, vector<8x128xf32>
    %4 = vector.extract_strided_slice %3 {offsets = [0, 0], sizes = [1, 128], strides = [1, 1]} : vector<8x128xf32> to vector<1x128xf32>
    %5 = vector.extract_strided_slice %3 {offsets = [1, 0], sizes = [1, 128], strides = [1, 1]} : vector<8x128xf32> to vector<1x128xf32>
    %6 = vector.extract_strided_slice %3 {offsets = [2, 0], sizes = [1, 128], strides = [1, 1]} : vector<8x128xf32> to vector<1x128xf32>
    %c0_4 = arith.constant 0 : index
    %c0_5 = arith.constant 0 : index
    %c0_6 = arith.constant 0 : index
    %7 = vector.load %arg1[%c0_4, %c0_5, %c0_6] : memref<1x8x64xf32, #tpu.memory_space<vmem>>, vector<1x8x64xf32>
    %8 = vector.shape_cast %7 : vector<1x8x64xf32> to vector<8x64xf32>
    %cst = arith.constant dense<0.000000e+00> : vector<8x128xf32>
    %9 = tpu.matmul %8, %0, %cst {dimension_numbers = #tpu.dot_dimension_numbers<[1], [0], [0], [1], [0, 0, 1, 1], [], []>} : vector<8x64xf32>, vector<64x128xf32>, vector<8x128xf32> -> vector<8x128xf32>
    %10 = vector.broadcast %4 : vector<1x128xf32> to vector<8x128xf32>
    %11 = arith.addf %9, %10 : vector<8x128xf32>
    %cst_7 = arith.constant 0.000000e+00 : f32
    %12 = vector.broadcast %cst_7 : f32 to vector<1x32xf32>
    %cst_8 = arith.constant 0.000000e+00 : f32
    %13 = vector.broadcast %cst_8 : f32 to vector<1x32xf32>
    %14 = vector.extract_strided_slice %11 {offsets = [0, 0], sizes = [1, 128], strides = [1, 1]} : vector<8x128xf32> to vector<1x128xf32>
    %cst_9 = arith.constant dense<0.000000e+00> : vector<1x128xf32>
    %15 = tpu.matmul %12, %1, %cst_9 {dimension_numbers = #tpu.dot_dimension_numbers<[1], [0], [0], [1], [0, 0, 1, 1], [], []>} : vector<1x32xf32>, vector<32x128xf32>, vector<1x128xf32> -> vector<1x128xf32>
    %16 = arith.addf %14, %15 : vector<1x128xf32>
    %17 = arith.negf %16 : vector<1x128xf32>
    %18 = math.exp %17 : vector<1x128xf32>
    %cst_10 = arith.constant 1.000000e+00 : f32
    %19 = vector.broadcast %cst_10 : f32 to vector<1x128xf32>
    %20 = arith.addf %19, %18 : vector<1x128xf32>
    %21 = arith.divf %19, %20 : vector<1x128xf32>
    %22 = math.tanh %16 : vector<1x128xf32>
    %23 = vector.extract_strided_slice %21 {offsets = [0, 0], sizes = [1, 32], strides = [1, 1]} : vector<1x128xf32> to vector<1x32xf32>
    %24 = vector.extract_strided_slice %21 {offsets = [0, 32], sizes = [1, 32], strides = [1, 1]} : vector<1x128xf32> to vector<1x32xf32>
    %25 = vector.extract_strided_slice %22 {offsets = [0, 64], sizes = [1, 32], strides = [1, 1]} : vector<1x128xf32> to vector<1x32xf32>
    %26 = vector.extract_strided_slice %21 {offsets = [0, 96], sizes = [1, 32], strides = [1, 1]} : vector<1x128xf32> to vector<1x32xf32>
    %27 = arith.mulf %24, %13 : vector<1x32xf32>
    %28 = arith.mulf %23, %25 : vector<1x32xf32>
    %29 = arith.addf %27, %28 : vector<1x32xf32>
    %30 = math.tanh %29 : vector<1x32xf32>
    %31 = arith.mulf %26, %30 : vector<1x32xf32>
    %32 = vector.extract_strided_slice %31 {offsets = [0, 0], sizes = [1, 16], strides = [1, 1]} : vector<1x32xf32> to vector<1x16xf32>
    %c0_11 = arith.constant 0 : index
    %c0_12 = arith.constant 0 : index
    %33 = vector.load %arg4[%c0_11, %c0_12] : memref<8x32xf32, #tpu.memory_space<vmem>>, vector<1x16xf32>
    tpu.vector_store %arg4[%c0_11, %c0_12], %32 {strides = array<i32>} : memref<8x32xf32, #tpu.memory_space<vmem>>, vector<1x16xf32>,
    %34 = vector.extract_strided_slice %31 {offsets = [0, 16], sizes = [1, 16], strides = [1, 1]} : vector<1x32xf32> to vector<1x16xf32>
    %c7 = arith.constant 7 : index
    %c16 = arith.constant 16 : index
    %35 = vector.load %arg4[%c7, %c16] : memref<8x32xf32, #tpu.memory_space<vmem>>, vector<1x16xf32>
    tpu.vector_store %arg4[%c7, %c16], %34 {strides = array<i32>} : memref<8x32xf32, #tpu.memory_space<vmem>>, vector<1x16xf32>,
    %36 = vector.extract_strided_slice %11 {offsets = [1, 0], sizes = [1, 128], strides = [1, 1]} : vector<8x128xf32> to vector<1x128xf32>
    %cst_13 = arith.constant dense<0.000000e+00> : vector<1x128xf32>
    %37 = tpu.matmul %31, %1, %cst_13 {dimension_numbers = #tpu.dot_dimension_numbers<[1], [0], [0], [1], [0, 0, 1, 1], [], []>} : vector<1x32xf32>, vector<32x128xf32>, vector<1x128xf32> -> vector<1x128xf32>
    %38 = arith.addf %36, %37 : vector<1x128xf32>
    %39 = arith.negf %38 : vector<1x128xf32>
    %40 = math.exp %39 : vector<1x128xf32>
    %cst_14 = arith.constant 1.000000e+00 : f32
    %41 = vector.broadcast %cst_14 : f32 to vector<1x128xf32>
    %42 = arith.addf %41, %40 : vector<1x128xf32>
    %43 = arith.divf %41, %42 : vector<1x128xf32>
    %44 = math.tanh %38 : vector<1x128xf32>
    %45 = vector.extract_strided_slice %43 {offsets = [0, 0], sizes = [1, 32], strides = [1, 1]} : vector<1x128xf32> to vector<1x32xf32>
    %46 = vector.extract_strided_slice %43 {offsets = [0, 32], sizes = [1, 32], strides = [1, 1]} : vector<1x128xf32> to vector<1x32xf32>
    %47 = vector.extract_strided_slice %44 {offsets = [0, 64], sizes = [1, 32], strides = [1, 1]} : vector<1x128xf32> to vector<1x32xf32>
    %48 = vector.extract_strided_slice %43 {offsets = [0, 96], sizes = [1, 32], strides = [1, 1]} : vector<1x128xf32> to vector<1x32xf32>
    %49 = arith.mulf %46, %29 : vector<1x32xf32>
    %50 = arith.mulf %45, %47 : vector<1x32xf32>
    %51 = arith.addf %49, %50 : vector<1x32xf32>
    %52 = math.tanh %51 : vector<1x32xf32>
    %53 = arith.mulf %48, %52 : vector<1x32xf32>
    %54 = vector.extract_strided_slice %53 {offsets = [0, 0], sizes = [1, 16], strides = [1, 1]} : vector<1x32xf32> to vector<1x16xf32>
    %c1 = arith.constant 1 : index
    %c0_15 = arith.constant 0 : index
    %55 = vector.load %arg4[%c1, %c0_15] : memref<8x32xf32, #tpu.memory_space<vmem>>, vector<1x16xf32>
    tpu.vector_store %arg4[%c1, %c0_15], %54 {strides = array<i32>} : memref<8x32xf32, #tpu.memory_space<vmem>>, vector<1x16xf32>,
    %56 = vector.extract_strided_slice %53 {offsets = [0, 16], sizes = [1, 16], strides = [1, 1]} : vector<1x32xf32> to vector<1x16xf32>
    %c6 = arith.constant 6 : index
    %c16_16 = arith.constant 16 : index
    %57 = vector.load %arg4[%c6, %c16_16] : memref<8x32xf32, #tpu.memory_space<vmem>>, vector<1x16xf32>
    tpu.vector_store %arg4[%c6, %c16_16], %56 {strides = array<i32>} : memref<8x32xf32, #tpu.memory_space<vmem>>, vector<1x16xf32>,
    %58 = vector.extract_strided_slice %11 {offsets = [2, 0], sizes = [1, 128], strides = [1, 1]} : vector<8x128xf32> to vector<1x128xf32>
    %cst_17 = arith.constant dense<0.000000e+00> : vector<1x128xf32>
    %59 = tpu.matmul %53, %1, %cst_17 {dimension_numbers = #tpu.dot_dimension_numbers<[1], [0], [0], [1], [0, 0, 1, 1], [], []>} : vector<1x32xf32>, vector<32x128xf32>, vector<1x128xf32> -> vector<1x128xf32>
    %60 = arith.addf %58, %59 : vector<1x128xf32>
    %61 = arith.negf %60 : vector<1x128xf32>
    %62 = math.exp %61 : vector<1x128xf32>
    %cst_18 = arith.constant 1.000000e+00 : f32
    %63 = vector.broadcast %cst_18 : f32 to vector<1x128xf32>
    %64 = arith.addf %63, %62 : vector<1x128xf32>
    %65 = arith.divf %63, %64 : vector<1x128xf32>
    %66 = math.tanh %60 : vector<1x128xf32>
    %67 = vector.extract_strided_slice %65 {offsets = [0, 0], sizes = [1, 32], strides = [1, 1]} : vector<1x128xf32> to vector<1x32xf32>
    %68 = vector.extract_strided_slice %65 {offsets = [0, 32], sizes = [1, 32], strides = [1, 1]} : vector<1x128xf32> to vector<1x32xf32>
    %69 = vector.extract_strided_slice %66 {offsets = [0, 64], sizes = [1, 32], strides = [1, 1]} : vector<1x128xf32> to vector<1x32xf32>
    %70 = vector.extract_strided_slice %65 {offsets = [0, 96], sizes = [1, 32], strides = [1, 1]} : vector<1x128xf32> to vector<1x32xf32>
    %71 = arith.mulf %68, %51 : vector<1x32xf32>
    %72 = arith.mulf %67, %69 : vector<1x32xf32>
    %73 = arith.addf %71, %72 : vector<1x32xf32>
    %74 = math.tanh %73 : vector<1x32xf32>
    %75 = arith.mulf %70, %74 : vector<1x32xf32>
    %76 = vector.extract_strided_slice %75 {offsets = [0, 0], sizes = [1, 16], strides = [1, 1]} : vector<1x32xf32> to vector<1x16xf32>
    %c2 = arith.constant 2 : index
    %c0_19 = arith.constant 0 : index
    %77 = vector.load %arg4[%c2, %c0_19] : memref<8x32xf32, #tpu.memory_space<vmem>>, vector<1x16xf32>
    tpu.vector_store %arg4[%c2, %c0_19], %76 {strides = array<i32>} : memref<8x32xf32, #tpu.memory_space<vmem>>, vector<1x16xf32>,
    %78 = vector.extract_strided_slice %75 {offsets = [0, 16], sizes = [1, 16], strides = [1, 1]} : vector<1x32xf32> to vector<1x16xf32>
    %c5 = arith.constant 5 : index
    %c16_20 = arith.constant 16 : index
    %79 = vector.load %arg4[%c5, %c16_20] : memref<8x32xf32, #tpu.memory_space<vmem>>, vector<1x16xf32>
    tpu.vector_store %arg4[%c5, %c16_20], %78 {strides = array<i32>} : memref<8x32xf32, #tpu.memory_space<vmem>>, vector<1x16xf32>,
    %80 = vector.extract_strided_slice %11 {offsets = [3, 0], sizes = [1, 128], strides = [1, 1]} : vector<8x128xf32> to vector<1x128xf32>
    %cst_21 = arith.constant dense<0.000000e+00> : vector<1x128xf32>
    %81 = tpu.matmul %75, %1, %cst_21 {dimension_numbers = #tpu.dot_dimension_numbers<[1], [0], [0], [1], [0, 0, 1, 1], [], []>} : vector<1x32xf32>, vector<32x128xf32>, vector<1x128xf32> -> vector<1x128xf32>
    %82 = arith.addf %80, %81 : vector<1x128xf32>
    %83 = arith.negf %82 : vector<1x128xf32>
    %84 = math.exp %83 : vector<1x128xf32>
    %cst_22 = arith.constant 1.000000e+00 : f32
    %85 = vector.broadcast %cst_22 : f32 to vector<1x128xf32>
    %86 = arith.addf %85, %84 : vector<1x128xf32>
    %87 = arith.divf %85, %86 : vector<1x128xf32>
    %88 = math.tanh %82 : vector<1x128xf32>
    %89 = vector.extract_strided_slice %87 {offsets = [0, 0], sizes = [1, 32], strides = [1, 1]} : vector<1x128xf32> to vector<1x32xf32>
    %90 = vector.extract_strided_slice %87 {offsets = [0, 32], sizes = [1, 32], strides = [1, 1]} : vector<1x128xf32> to vector<1x32xf32>
    %91 = vector.extract_strided_slice %88 {offsets = [0, 64], sizes = [1, 32], strides = [1, 1]} : vector<1x128xf32> to vector<1x32xf32>
    %92 = vector.extract_strided_slice %87 {offsets = [0, 96], sizes = [1, 32], strides = [1, 1]} : vector<1x128xf32> to vector<1x32xf32>
    %93 = arith.mulf %90, %73 : vector<1x32xf32>
    %94 = arith.mulf %89, %91 : vector<1x32xf32>
    %95 = arith.addf %93, %94 : vector<1x32xf32>
    %96 = math.tanh %95 : vector<1x32xf32>
    %97 = arith.mulf %92, %96 : vector<1x32xf32>
    %98 = vector.extract_strided_slice %97 {offsets = [0, 0], sizes = [1, 16], strides = [1, 1]} : vector<1x32xf32> to vector<1x16xf32>
    %c3 = arith.constant 3 : index
    %c0_23 = arith.constant 0 : index
    %99 = vector.load %arg4[%c3, %c0_23] : memref<8x32xf32, #tpu.memory_space<vmem>>, vector<1x16xf32>
    tpu.vector_store %arg4[%c3, %c0_23], %98 {strides = array<i32>} : memref<8x32xf32, #tpu.memory_space<vmem>>, vector<1x16xf32>,
    %100 = vector.extract_strided_slice %97 {offsets = [0, 16], sizes = [1, 16], strides = [1, 1]} : vector<1x32xf32> to vector<1x16xf32>
    %c4 = arith.constant 4 : index
    %c16_24 = arith.constant 16 : index
    %101 = vector.load %arg4[%c4, %c16_24] : memref<8x32xf32, #tpu.memory_space<vmem>>, vector<1x16xf32>
    tpu.vector_store %arg4[%c4, %c16_24], %100 {strides = array<i32>} : memref<8x32xf32, #tpu.memory_space<vmem>>, vector<1x16xf32>,
    %102 = vector.extract_strided_slice %11 {offsets = [4, 0], sizes = [1, 128], strides = [1, 1]} : vector<8x128xf32> to vector<1x128xf32>
    %cst_25 = arith.constant dense<0.000000e+00> : vector<1x128xf32>
    %103 = tpu.matmul %97, %1, %cst_25 {dimension_numbers = #tpu.dot_dimension_numbers<[1], [0], [0], [1], [0, 0, 1, 1], [], []>} : vector<1x32xf32>, vector<32x128xf32>, vector<1x128xf32> -> vector<1x128xf32>
    %104 = arith.addf %102, %103 : vector<1x128xf32>
    %105 = arith.negf %104 : vector<1x128xf32>
    %106 = math.exp %105 : vector<1x128xf32>
    %cst_26 = arith.constant 1.000000e+00 : f32
    %107 = vector.broadcast %cst_26 : f32 to vector<1x128xf32>
    %108 = arith.addf %107, %106 : vector<1x128xf32>
    %109 = arith.divf %107, %108 : vector<1x128xf32>
    %110 = math.tanh %104 : vector<1x128xf32>
    %111 = vector.extract_strided_slice %109 {offsets = [0, 0], sizes = [1, 32], strides = [1, 1]} : vector<1x128xf32> to vector<1x32xf32>
    %112 = vector.extract_strided_slice %109 {offsets = [0, 32], sizes = [1, 32], strides = [1, 1]} : vector<1x128xf32> to vector<1x32xf32>
    %113 = vector.extract_strided_slice %110 {offsets = [0, 64], sizes = [1, 32], strides = [1, 1]} : vector<1x128xf32> to vector<1x32xf32>
    %114 = vector.extract_strided_slice %109 {offsets = [0, 96], sizes = [1, 32], strides = [1, 1]} : vector<1x128xf32> to vector<1x32xf32>
    %115 = arith.mulf %112, %95 : vector<1x32xf32>
    %116 = arith.mulf %111, %113 : vector<1x32xf32>
    %117 = arith.addf %115, %116 : vector<1x32xf32>
    %118 = math.tanh %117 : vector<1x32xf32>
    %119 = arith.mulf %114, %118 : vector<1x32xf32>
    %120 = vector.extract_strided_slice %119 {offsets = [0, 0], sizes = [1, 16], strides = [1, 1]} : vector<1x32xf32> to vector<1x16xf32>
    %c4_27 = arith.constant 4 : index
    %c0_28 = arith.constant 0 : index
    %121 = vector.load %arg4[%c4_27, %c0_28] : memref<8x32xf32, #tpu.memory_space<vmem>>, vector<1x16xf32>
    tpu.vector_store %arg4[%c4_27, %c0_28], %120 {strides = array<i32>} : memref<8x32xf32, #tpu.memory_space<vmem>>, vector<1x16xf32>,
    %122 = vector.extract_strided_slice %119 {offsets = [0, 16], sizes = [1, 16], strides = [1, 1]} : vector<1x32xf32> to vector<1x16xf32>
    %c3_29 = arith.constant 3 : index
    %c16_30 = arith.constant 16 : index
    %123 = vector.load %arg4[%c3_29, %c16_30] : memref<8x32xf32, #tpu.memory_space<vmem>>, vector<1x16xf32>
    tpu.vector_store %arg4[%c3_29, %c16_30], %122 {strides = array<i32>} : memref<8x32xf32, #tpu.memory_space<vmem>>, vector<1x16xf32>,
    %124 = vector.extract_strided_slice %11 {offsets = [5, 0], sizes = [1, 128], strides = [1, 1]} : vector<8x128xf32> to vector<1x128xf32>
    %cst_31 = arith.constant dense<0.000000e+00> : vector<1x128xf32>
    %125 = tpu.matmul %119, %1, %cst_31 {dimension_numbers = #tpu.dot_dimension_numbers<[1], [0], [0], [1], [0, 0, 1, 1], [], []>} : vector<1x32xf32>, vector<32x128xf32>, vector<1x128xf32> -> vector<1x128xf32>
    %126 = arith.addf %124, %125 : vector<1x128xf32>
    %127 = arith.negf %126 : vector<1x128xf32>
    %128 = math.exp %127 : vector<1x128xf32>
    %cst_32 = arith.constant 1.000000e+00 : f32
    %129 = vector.broadcast %cst_32 : f32 to vector<1x128xf32>
    %130 = arith.addf %129, %128 : vector<1x128xf32>
    %131 = arith.divf %129, %130 : vector<1x128xf32>
    %132 = math.tanh %126 : vector<1x128xf32>
    %133 = vector.extract_strided_slice %131 {offsets = [0, 0], sizes = [1, 32], strides = [1, 1]} : vector<1x128xf32> to vector<1x32xf32>
    %134 = vector.extract_strided_slice %131 {offsets = [0, 32], sizes = [1, 32], strides = [1, 1]} : vector<1x128xf32> to vector<1x32xf32>
    %135 = vector.extract_strided_slice %132 {offsets = [0, 64], sizes = [1, 32], strides = [1, 1]} : vector<1x128xf32> to vector<1x32xf32>
    %136 = vector.extract_strided_slice %131 {offsets = [0, 96], sizes = [1, 32], strides = [1, 1]} : vector<1x128xf32> to vector<1x32xf32>
    %137 = arith.mulf %134, %117 : vector<1x32xf32>
    %138 = arith.mulf %133, %135 : vector<1x32xf32>
    %139 = arith.addf %137, %138 : vector<1x32xf32>
    %140 = math.tanh %139 : vector<1x32xf32>
    %141 = arith.mulf %136, %140 : vector<1x32xf32>
    %142 = vector.extract_strided_slice %141 {offsets = [0, 0], sizes = [1, 16], strides = [1, 1]} : vector<1x32xf32> to vector<1x16xf32>
    %c5_33 = arith.constant 5 : index
    %c0_34 = arith.constant 0 : index
    %143 = vector.load %arg4[%c5_33, %c0_34] : memref<8x32xf32, #tpu.memory_space<vmem>>, vector<1x16xf32>
    tpu.vector_store %arg4[%c5_33, %c0_34], %142 {strides = array<i32>} : memref<8x32xf32, #tpu.memory_space<vmem>>, vector<1x16xf32>,
    %144 = vector.extract_strided_slice %141 {offsets = [0, 16], sizes = [1, 16], strides = [1, 1]} : vector<1x32xf32> to vector<1x16xf32>
    %c2_35 = arith.constant 2 : index
    %c16_36 = arith.constant 16 : index
    %145 = vector.load %arg4[%c2_35, %c16_36] : memref<8x32xf32, #tpu.memory_space<vmem>>, vector<1x16xf32>
    tpu.vector_store %arg4[%c2_35, %c16_36], %144 {strides = array<i32>} : memref<8x32xf32, #tpu.memory_space<vmem>>, vector<1x16xf32>,
    %146 = vector.extract_strided_slice %11 {offsets = [6, 0], sizes = [1, 128], strides = [1, 1]} : vector<8x128xf32> to vector<1x128xf32>
    %cst_37 = arith.constant dense<0.000000e+00> : vector<1x128xf32>
    %147 = tpu.matmul %141, %1, %cst_37 {dimension_numbers = #tpu.dot_dimension_numbers<[1], [0], [0], [1], [0, 0, 1, 1], [], []>} : vector<1x32xf32>, vector<32x128xf32>, vector<1x128xf32> -> vector<1x128xf32>
    %148 = arith.addf %146, %147 : vector<1x128xf32>
    %149 = arith.negf %148 : vector<1x128xf32>
    %150 = math.exp %149 : vector<1x128xf32>
    %cst_38 = arith.constant 1.000000e+00 : f32
    %151 = vector.broadcast %cst_38 : f32 to vector<1x128xf32>
    %152 = arith.addf %151, %150 : vector<1x128xf32>
    %153 = arith.divf %151, %152 : vector<1x128xf32>
    %154 = math.tanh %148 : vector<1x128xf32>
    %155 = vector.extract_strided_slice %153 {offsets = [0, 0], sizes = [1, 32], strides = [1, 1]} : vector<1x128xf32> to vector<1x32xf32>
    %156 = vector.extract_strided_slice %153 {offsets = [0, 32], sizes = [1, 32], strides = [1, 1]} : vector<1x128xf32> to vector<1x32xf32>
    %157 = vector.extract_strided_slice %154 {offsets = [0, 64], sizes = [1, 32], strides = [1, 1]} : vector<1x128xf32> to vector<1x32xf32>
    %158 = vector.extract_strided_slice %153 {offsets = [0, 96], sizes = [1, 32], strides = [1, 1]} : vector<1x128xf32> to vector<1x32xf32>
    %159 = arith.mulf %156, %139 : vector<1x32xf32>
    %160 = arith.mulf %155, %157 : vector<1x32xf32>
    %161 = arith.addf %159, %160 : vector<1x32xf32>
    %162 = math.tanh %161 : vector<1x32xf32>
    %163 = arith.mulf %158, %162 : vector<1x32xf32>
    %164 = vector.extract_strided_slice %163 {offsets = [0, 0], sizes = [1, 16], strides = [1, 1]} : vector<1x32xf32> to vector<1x16xf32>
    %c6_39 = arith.constant 6 : index
    %c0_40 = arith.constant 0 : index
    %165 = vector.load %arg4[%c6_39, %c0_40] : memref<8x32xf32, #tpu.memory_space<vmem>>, vector<1x16xf32>
    tpu.vector_store %arg4[%c6_39, %c0_40], %164 {strides = array<i32>} : memref<8x32xf32, #tpu.memory_space<vmem>>, vector<1x16xf32>,
    %166 = vector.extract_strided_slice %163 {offsets = [0, 16], sizes = [1, 16], strides = [1, 1]} : vector<1x32xf32> to vector<1x16xf32>
    %c1_41 = arith.constant 1 : index
    %c16_42 = arith.constant 16 : index
    %167 = vector.load %arg4[%c1_41, %c16_42] : memref<8x32xf32, #tpu.memory_space<vmem>>, vector<1x16xf32>
    tpu.vector_store %arg4[%c1_41, %c16_42], %166 {strides = array<i32>} : memref<8x32xf32, #tpu.memory_space<vmem>>, vector<1x16xf32>,
    %168 = vector.extract_strided_slice %11 {offsets = [7, 0], sizes = [1, 128], strides = [1, 1]} : vector<8x128xf32> to vector<1x128xf32>
    %cst_43 = arith.constant dense<0.000000e+00> : vector<1x128xf32>
    %169 = tpu.matmul %163, %1, %cst_43 {dimension_numbers = #tpu.dot_dimension_numbers<[1], [0], [0], [1], [0, 0, 1, 1], [], []>} : vector<1x32xf32>, vector<32x128xf32>, vector<1x128xf32> -> vector<1x128xf32>
    %170 = arith.addf %168, %169 : vector<1x128xf32>
    %171 = arith.negf %170 : vector<1x128xf32>
    %172 = math.exp %171 : vector<1x128xf32>
    %cst_44 = arith.constant 1.000000e+00 : f32
    %173 = vector.broadcast %cst_44 : f32 to vector<1x128xf32>
    %174 = arith.addf %173, %172 : vector<1x128xf32>
    %175 = arith.divf %173, %174 : vector<1x128xf32>
    %176 = math.tanh %170 : vector<1x128xf32>
    %177 = vector.extract_strided_slice %175 {offsets = [0, 0], sizes = [1, 32], strides = [1, 1]} : vector<1x128xf32> to vector<1x32xf32>
    %178 = vector.extract_strided_slice %175 {offsets = [0, 32], sizes = [1, 32], strides = [1, 1]} : vector<1x128xf32> to vector<1x32xf32>
    %179 = vector.extract_strided_slice %176 {offsets = [0, 64], sizes = [1, 32], strides = [1, 1]} : vector<1x128xf32> to vector<1x32xf32>
    %180 = vector.extract_strided_slice %175 {offsets = [0, 96], sizes = [1, 32], strides = [1, 1]} : vector<1x128xf32> to vector<1x32xf32>
    %181 = arith.mulf %178, %161 : vector<1x32xf32>
    %182 = arith.mulf %177, %179 : vector<1x32xf32>
    %183 = arith.addf %181, %182 : vector<1x32xf32>
    %184 = math.tanh %183 : vector<1x32xf32>
    %185 = arith.mulf %180, %184 : vector<1x32xf32>
    %186 = vector.extract_strided_slice %185 {offsets = [0, 0], sizes = [1, 16], strides = [1, 1]} : vector<1x32xf32> to vector<1x16xf32>
    %c7_45 = arith.constant 7 : index
    %c0_46 = arith.constant 0 : index
    %187 = vector.load %arg4[%c7_45, %c0_46] : memref<8x32xf32, #tpu.memory_space<vmem>>, vector<1x16xf32>
    tpu.vector_store %arg4[%c7_45, %c0_46], %186 {strides = array<i32>} : memref<8x32xf32, #tpu.memory_space<vmem>>, vector<1x16xf32>,
    %188 = vector.extract_strided_slice %185 {offsets = [0, 16], sizes = [1, 16], strides = [1, 1]} : vector<1x32xf32> to vector<1x16xf32>
    %c0_47 = arith.constant 0 : index
    %c16_48 = arith.constant 16 : index
    %189 = vector.load %arg4[%c0_47, %c16_48] : memref<8x32xf32, #tpu.memory_space<vmem>>, vector<1x16xf32>
    tpu.vector_store %arg4[%c0_47, %c16_48], %188 {strides = array<i32>} : memref<8x32xf32, #tpu.memory_space<vmem>>, vector<1x16xf32>,
    %c0_49 = arith.constant 0 : index
    %c0_50 = arith.constant 0 : index
    %190 = vector.load %arg4[%c0_49, %c0_50] : memref<8x32xf32, #tpu.memory_space<vmem>>, vector<8x32xf32>
    %cst_51 = arith.constant dense<0.000000e+00> : vector<8x128xf32>
    %191 = tpu.matmul %190, %2, %cst_51 {dimension_numbers = #tpu.dot_dimension_numbers<[1], [0], [0], [1], [0, 0, 1, 1], [], []>} : vector<8x32xf32>, vector<32x128xf32>, vector<8x128xf32> -> vector<8x128xf32>
    %192 = vector.broadcast %5 : vector<1x128xf32> to vector<8x128xf32>
    %193 = arith.addf %191, %192 : vector<8x128xf32>
    %194 = vector.broadcast %6 : vector<1x128xf32> to vector<8x128xf32>
    %195 = arith.addf %193, %194 : vector<8x128xf32>
    %196 = vector.extract_strided_slice %195 {offsets = [0, 0], sizes = [8, 1], strides = [1, 1]} : vector<8x128xf32> to vector<8x1xf32>
    %197 = vector.extract_strided_slice %195 {offsets = [0, 1], sizes = [8, 1], strides = [1, 1]} : vector<8x128xf32> to vector<8x1xf32>
    %198 = vector.extract_strided_slice %195 {offsets = [0, 2], sizes = [8, 1], strides = [1, 1]} : vector<8x128xf32> to vector<8x1xf32>
    %199 = arith.maximumf %196, %197 : vector<8x1xf32>
    %200 = arith.cmpf ogt, %198, %199 : vector<8x1xf32>
    %201 = arith.cmpf ogt, %197, %196 : vector<8x1xf32>
    %cst_52 = arith.constant 1.000000e+00 : f32
    %cst_53 = arith.constant 0.000000e+00 : f32
    %202 = vector.broadcast %cst_52 : f32 to vector<8x1xf32>
    %203 = vector.broadcast %cst_53 : f32 to vector<8x1xf32>
    %204 = arith.select %201, %202, %203 : vector<8x1xi1>, vector<8x1xf32>
    %cst_54 = arith.constant 2.000000e+00 : f32
    %205 = vector.broadcast %cst_54 : f32 to vector<8x1xf32>
    %206 = arith.select %200, %205, %204 : vector<8x1xi1>, vector<8x1xf32>
    %207 = tpu.iota {dimensions = array<i32: 1>} : vector<8x128xi32>
    %c3_i32 = arith.constant 3 : i32
    %208 = vector.broadcast %c3_i32 : i32 to vector<8x128xi32>
    %209 = arith.cmpi eq, %207, %208 : vector<8x128xi32>
    %210 = vector.shape_cast %206 : vector<8x1xf32> to vector<8x1xf32>
    %211 = vector.broadcast %210 : vector<8x1xf32> to vector<8x128xf32>
    %212 = arith.select %209, %211, %193 : vector<8x128xi1>, vector<8x128xf32>
    %c0_55 = arith.constant 0 : index
    %c0_56 = arith.constant 0 : index
    %c0_57 = arith.constant 0 : index
    %213 = vector.load %arg3[%c0_55, %c0_56, %c0_57] : memref<1x8x128xf32, #tpu.memory_space<vmem>>, vector<1x8x128xf32>
    %214 = vector.shape_cast %213 : vector<1x8x128xf32> to vector<8x128xf32>
    %215 = vector.shape_cast %212 : vector<8x128xf32> to vector<1x8x128xf32>
    tpu.vector_store %arg3[%c0_55, %c0_56, %c0_57], %215 {strides = array<i32>} : memref<1x8x128xf32, #tpu.memory_space<vmem>>, vector<1x8x128xf32>,
    return
  }
  func.func @transform_0(%arg0: i32) -> (i32, i32, i32) {
    %c0_i32 = arith.constant 0 : i32
    %c0_i32_0 = arith.constant 0 : i32
    %c0_i32_1 = arith.constant 0 : i32
    return %arg0, %c0_i32, %c0_i32_0 : i32, i32, i32
  }
  func.func @transform_1(%arg0: i32) -> (i32, i32) {
    %c0_i32 = arith.constant 0 : i32
    %c0_i32_0 = arith.constant 0 : i32
    %c0_i32_1 = arith.constant 0 : i32
    return %c0_i32, %c0_i32_0 : i32, i32
  }
  func.func @transform_2(%arg0: i32) -> (i32, i32, i32) {
    %c0_i32 = arith.constant 0 : i32
    %c0_i32_0 = arith.constant 0 : i32
    %c0_i32_1 = arith.constant 0 : i32
    return %arg0, %c0_i32, %c0_i32_0 : i32, i32, i32
  }
}

</mosaic_0001>

<llo_original>
// kernel: tpu_custom_call.1
$region0: #{tpu_custom_call.1}
  #allocation0 [shape = 'u32[]', space=smem, size = 0x4, offset = 0x4, fixed_abs, tag = 'smem constant byte address 0x4 - core index']
  #allocation1 [shape = 'u32[72,128]{1,0:T(1,128)}', space=vmem, size = 0x9000, scoped, tag = 'internal scratch']
  #allocation2 [shape = 'f32[8,32]{1,0:T(8,128)}', space=vmem, size = 0x1000, scoped, tag = 'scratch operand']
  %s0 = inlined_call_operand.hbm [shape: f32[4,8,64], index: 0, kind: input, shape index: {}]
  %s1 = inlined_call_operand.hbm [shape: f32[136,128], index: 1, kind: input, shape index: {}]
  %s2 = inlined_call_operand.hbm [shape: f32[4,8,128], index: 2, kind: output, shape index: {}]
  %s3 = sld [smem:[#allocation0]]
  $region49: #{tpu_custom_call.1} parent=0
    _
  %s5 = ssub.s32 1, %s3
  %s6 = scalar_select 0, %s5, %s3
  $region1: #{tpu_custom_call.1} parent=0
    #allocation3 [shape = 'u8[8192]{0}', space=vmem, size = 0x2000, scoped, tag = 'input window, operand 0']
    #allocation4 [shape = 's32[2]{0}', space=sflag, size = 0x8, scoped, tag = 'scoped memory for tpu_custom_call.1']
    #allocation5 [shape = 's32[2]{0}', space=sflag, size = 0x8, scoped, tag = 'scoped memory for tpu_custom_call.1']
    #allocation6 [shape = 'u8[69632]{0}', space=vmem, size = 0x11000, scoped, tag = 'input window, operand 1, single buffered']
    #allocation7 [shape = 's32[1]{0}', space=sflag, size = 0x4, scoped, tag = 'scoped memory for tpu_custom_call.1']
    #allocation8 [shape = 'u8[8192]{0}', space=vmem, size = 0x2000, scoped, tag = 'output window, operand 0']
    %7 = vsyncpa [#allocation4], 0
    %s8 = scalar_lea.sflag [#allocation4], 1
    %9 = vsyncpa %s8, 0
    %10 = vsyncpa [#allocation7], 0
    %11 = vsyncpa [#allocation5], 0
    %s12 = scalar_lea.sflag [#allocation5], 1
    %13 = vsyncpa %s12, 0
    loop: start=0, step=1, limit=6
    $region2: #{tpu_custom_call.1} parent=1 // loop_pre_header
      _
    $region3: #{tpu_custom_call.1} parent=1 // loop_header
      %s15 = sphi 0, %s19
      %p16 = scmp.ge.s32.totalorder %s15, 6
      %s25 = sphi 0, %s27
      %s28 = sphi 0, %s25
      %s29 = sphi 0, %s28
      %s45 = sphi 0, %s29
      %s49 = sphi 0, %s49
      %s51 = sphi 0, %s49
      %s52 = sphi 0, %s51
      %s66 = sphi 0, %s52
      %s72 = sphi 0, %s74
      %s75 = sphi 0, %s72
      %s76 = sphi 0, %s75
      %s92 = sphi 0, %s76
    $region4: #{tpu_custom_call.1} parent=1 // loop_header_branch
      %18 = sbr.rel (%p16) target = $region8
    $region5: #{tpu_custom_call.1} parent=1 // loop_body
      %s20 = ssub.s32 %s15, 1
      %s21 = ssub.s32 %s15, 2
      %s22 = sadd.s32 %s15, 1
      %s23 = ssub.s32 %s15, %s22
      %p24 = scmp.eq.s32.totalorder %s23, 0
      %s26 = sadd.s32 %s25, 1
      %s27 = scalar_select %p24, %s25, %s26
      %p30 = pneg %p24
      %p31 = scmp.eq.s32.totalorder %s15, 3
      %p32 = por %p30, %p31
      %p33 = scmp.ne.s32.totalorder %s25, %s28
      %p34 = scmp.eq.s32.totalorder %s15, 0
      %p35 = por %p33, %p34
      %p36 = scmp.ne.s32.totalorder %s25, %s28
      %p37 = scmp.eq.s32.totalorder %s20, 3
      %p38 = por %p36, %p37
      %p39 = scmp.ne.s32.totalorder %s28, %s29
      %p40 = scmp.eq.s32.totalorder %s20, 0
      %p41 = por %p39, %p40
      %p42 = scmp.ne.s32.totalorder %s28, %s29
      %p43 = scmp.eq.s32.totalorder %s21, 3
      %p44 = por %p42, %p43
      %p46 = scmp.ne.s32.totalorder %s29, %s45
      %p47 = scmp.eq.s32.totalorder %s21, 0
      %p48 = por %p46, %p47
      %s50 = sadd.s32 %s49, 1
      %p53 = scmp.eq.s32.totalorder %s15, 3
      %p54 = scmp.ne.s32.totalorder %s49, %s51
      %p55 = scmp.eq.s32.totalorder %s15, 0
      %p56 = por %p54, %p55
      %p57 = scmp.ne.s32.totalorder %s49, %s51
      %p58 = scmp.eq.s32.totalorder %s20, 3
      %p59 = por %p57, %p58
      %p60 = scmp.ne.s32.totalorder %s51, %s52
      %p61 = scmp.eq.s32.totalorder %s20, 0
      %p62 = por %p60, %p61
      %p63 = scmp.ne.s32.totalorder %s51, %s52
      %p64 = scmp.eq.s32.totalorder %s21, 3
      %p65 = por %p63, %p64
      %p67 = scmp.ne.s32.totalorder %s52, %s66
      %p68 = scmp.eq.s32.totalorder %s21, 0
      %p69 = por %p67, %p68
      %s70 = ssub.s32 %s15, %s22
      %p71 = scmp.eq.s32.totalorder %s70, 0
      %s73 = sadd.s32 %s72, 1
      %s74 = scalar_select %p71, %s72, %s73
      %p77 = pneg %p71
      %p78 = scmp.eq.s32.totalorder %s15, 3
      %p79 = por %p77, %p78
      %p80 = scmp.ne.s32.totalorder %s72, %s75
      %p81 = scmp.eq.s32.totalorder %s15, 0
      %p82 = por %p80, %p81
      %p83 = scmp.ne.s32.totalorder %s72, %s75
      %p84 = scmp.eq.s32.totalorder %s20, 3
      %p85 = por %p83, %p84
      %p86 = scmp.ne.s32.totalorder %s75, %s76
      %p87 = scmp.eq.s32.totalorder %s20, 0
      %p88 = por %p86, %p87
      %p89 = scmp.ne.s32.totalorder %s75, %s76
      %p90 = scmp.eq.s32.totalorder %s21, 3
      %p91 = por %p89, %p90
      %p93 = scmp.ne.s32.totalorder %s76, %s92
      %p94 = scmp.eq.s32.totalorder %s21, 0
      %p95 = por %p93, %p94
      %p96 = scmp.le.s32.totalorder 1, %s15
      %p97 = scmp.lt.s32.totalorder %s15, 5
      %p98 = pnand %p96, %p97
      %p99 = pneg %p98
      // Predicated region
      $region9: #{tpu_custom_call.1} parent=5 // pred_check
        _
      $region10: #{tpu_custom_call.1} parent=5 // pred_check_branch
        %101 = sbr.rel (%p98) target = $region12
      $region11: #{tpu_custom_call.1} parent=5 // pred_region
        %s102 = ssub.s32 %s15, 1
        // Predicated region
        $region13: #{tpu_custom_call.1} parent=11 // pred_check
          %p103 = pneg %p62
        $region14: #{tpu_custom_call.1} parent=11 // pred_check_branch
          %105 = sbr.rel (%p103) target = $region16
        $region15: #{tpu_custom_call.1} parent=11 // pred_region
          %107 = vsyncadd [#allocation7], 0
          %s108 = sshll.u32 %s1, 4
          %s109 = int_to_ptr.hbm [resolvable:$true] %s108
          %s110 = sshll.u32 [#allocation6], 4
          %s111 = int_to_ptr.vmem [resolvable:$true] %s110
          %116 = dma.hbm_to_vmem [thread:$0]  %s109, 2176, %s111, [#allocation7], 128, 128, 8
        $region16: #{tpu_custom_call.1} parent=11 // pred_fallthru
          _
      $region12: #{tpu_custom_call.1} parent=5 // pred_fallthru
        _
      %p117 = scmp.lt.s32.totalorder %s15, 4
      // Predicated region
      $region17: #{tpu_custom_call.1} parent=5 // pred_check
        %p118 = pneg %p117
      $region18: #{tpu_custom_call.1} parent=5 // pred_check_branch
        %120 = sbr.rel (%p118) target = $region20
      $region19: #{tpu_custom_call.1} parent=5 // pred_region
        // Predicated region
        $region21: #{tpu_custom_call.1} parent=19 // pred_check
          %p121 = pneg %p35
        $region22: #{tpu_custom_call.1} parent=19 // pred_check_branch
          %123 = sbr.rel (%p121) target = $region24
        $region23: #{tpu_custom_call.1} parent=19 // pred_region
          %s124 = sand.u32 %s25, 1
          %s125 = scalar_lea.sflag [#allocation4], %s124
          %s126 = sand.u32 %s25, 1
          %s127 = smul.addr %s126, 8
          %s128 = scalar_lea.vmem [#allocation3], %s127
          %130 = vsyncadd %s125, 0
          %s131 = smul.addr %s15, 8
          %s132 = scalar_lea.hbm %s0, %s131
          %s134 = sshll.u32 %s132, 4
          %s135 = int_to_ptr.hbm [resolvable:$true] %s134
          %s136 = sshll.u32 %s128, 4
          %s137 = int_to_ptr.vmem [resolvable:$true] %s136
          %139 = dma.hbm_to_vmem [thread:$0]  %s135, 128, %s137, %s125
        $region24: #{tpu_custom_call.1} parent=19 // pred_fallthru
          _
      $region20: #{tpu_custom_call.1} parent=5 // pred_fallthru
        _
      %p140 = scmp.le.s32.totalorder 1, %s15
      %p141 = scmp.lt.s32.totalorder %s15, 5
      %p142 = pnand %p140, %p141
      %p143 = pneg %p142
      // Predicated region
      $region25: #{tpu_custom_call.1} parent=5 // pred_check
        _
      $region26: #{tpu_custom_call.1} parent=5 // pred_check_branch
        %145 = sbr.rel (%p142) target = $region28
      $region27: #{tpu_custom_call.1} parent=5 // pred_region
        %s146 = ssub.s32 %s15, 1
        %s147 = sand.u32 %s28, 1
        %s148 = scalar_lea.sflag [#allocation4], %s147
        %s149 = sand.u32 %s28, 1
        %s150 = smul.addr %s149, 8
        %s151 = scalar_lea.vmem [#allocation3], %s150
        // Predicated region
        $region29: #{tpu_custom_call.1} parent=27 // pred_check
          %p152 = pneg %p41
        $region30: #{tpu_custom_call.1} parent=27 // pred_check_branch
          %154 = sbr.rel (%p152) target = $region32
        $region31: #{tpu_custom_call.1} parent=27 // pred_region
          %156 = dma.done %s148, 128
        $region32: #{tpu_custom_call.1} parent=27 // pred_fallthru
          _
        // Predicated region
        $region33: #{tpu_custom_call.1} parent=27 // pred_check
          %p157 = pneg %p62
        $region34: #{tpu_custom_call.1} parent=27 // pred_check_branch
          %159 = sbr.rel (%p157) target = $region36
        $region35: #{tpu_custom_call.1} parent=27 // pred_region
          %161 = dma.done [#allocation7], 2176
        $region36: #{tpu_custom_call.1} parent=27 // pred_fallthru
          _
        %s162 = sand.u32 %s28, 1
        %s163 = scalar_lea.sflag [#allocation4], %s162
        %s164 = sand.u32 %s28, 1
        %s165 = smul.addr %s164, 8
        %s166 = scalar_lea.vmem [#allocation3], %s165
        %p167 = pneg %p41
        %p168 = pneg %p38
        %p169 = pneg %p62
        %p170 = pneg %p59
        %p171 = pneg %p88
        %p172 = pneg %p85
        %s173 = sand.u32 %s75, 1
        %s174 = scalar_lea.sflag [#allocation5], %s173
        %s175 = sand.u32 %s75, 1
        %s176 = smul.addr %s175, 8
        %s177 = scalar_lea.vmem [#allocation8], %s176
        %v178 = vld [vmem:[#allocation6] sm:$0xff]
        %v179 = vld [vmem:[#allocation6 + $0x8] sm:$0xff]
        %v180 = vld [vmem:[#allocation6 + $0x10] sm:$0xff]
        %v181 = vld [vmem:[#allocation6 + $0x18] sm:$0xff]
        %v182 = vld [vmem:[#allocation6 + $0x20] sm:$0xff]
        %v183 = vld [vmem:[#allocation6 + $0x28] sm:$0xff]
        %v184 = vld [vmem:[#allocation6 + $0x30] sm:$0xff]
        %v185 = vld [vmem:[#allocation6 + $0x38] sm:$0xff]
        %v186 = vld [vmem:[#allocation6 + $0x40] sm:$0xff]
        %v187 = vld [vmem:[#allocation6 + $0x48] sm:$0xff]
        %v188 = vld [vmem:[#allocation6 + $0x50] sm:$0xff]
        %v189 = vld [vmem:[#allocation6 + $0x58] sm:$0xff]
        %v190 = vld [vmem:[#allocation6 + $0x60] sm:$0xff]
        %v191 = vld [vmem:[#allocation6 + $0x68] sm:$0xff]
        %v192 = vld [vmem:[#allocation6 + $0x70] sm:$0xff]
        %v193 = vld [vmem:[#allocation6 + $0x78] sm:$0xff]
        %v194 = vld [vmem:[#allocation6 + $0x80] sm:$0xff]
        %v195 = vld [vmem:[%s151] sm:$0xff]
        %v196 = vperm.slane %v194, 0
        %vm197 = vcmask 523264
        %v199 = vsel %vm197, %v195, 0
        %201 = vmatpush.msra.mxu0 0.0
        %202 = vmatpush.msra.mxu0 0.0
        %203 = vmatpush.msra.mxu0 0.0
        %204 = vmatpush.msra.mxu0 0.0
        %205 = vmatpush.msra.mxu0 0.0
        %206 = vmatpush.msra.mxu0 0.0
        %207 = vmatpush.msra.mxu0 0.0
        %208 = vmatpush.msra.mxu0 0.0
        %209 = vmatpush.msra.mxu0 %v185
        %210 = vmatpush.msra.mxu0 %v184
        %211 = vmatpush.msra.mxu0 %v183
        %212 = vmatpush.msra.mxu0 %v182
        %213 = vmatpush.msra.mxu0 %v181
        %214 = vmatpush.msra.mxu0 %v180
        %215 = vmatpush.msra.mxu0 %v179
        %216 = vmatpush.msra.mxu0 %v178
        %217 = vmatmul.f32.gmra.mxu0 %v199
        %v218 = vpop.f32.mrf.mxu0
        %v219 = vadd.f32 %v196, %v218
        %220 = vdwg.mxu0
        %vm221 = vcmask 261120
        %v223 = vsel %vm221, 0.0, 0
        %225 = vmatpush.msra.mxu0 0.0
        %226 = vmatpush.msra.mxu0 0.0
        %227 = vmatpush.msra.mxu0 0.0
        %228 = vmatpush.msra.mxu0 0.0
        %229 = vmatpush.msra.mxu0 0.0
        %230 = vmatpush.msra.mxu0 0.0
        %231 = vmatpush.msra.mxu0 0.0
        %232 = vmatpush.msra.mxu0 0.0
        %233 = vmatpush.msra.mxu0 0.0
        %234 = vmatpush.msra.mxu0 0.0
        %235 = vmatpush.msra.mxu0 0.0
        %236 = vmatpush.msra.mxu0 0.0
        %237 = vmatpush.msra.mxu0 %v189
        %238 = vmatpush.msra.mxu0 %v188
        %239 = vmatpush.msra.mxu0 %v187
        %240 = vmatpush.msra.mxu0 %v186
        %241 = vmatmul.f32.gmra.mxu0 %v223
        %v242 = vpop.f32.mrf.mxu0
        %v243 = vadd.f32 0.0, %v242
        %244 = vdwg.mxu0
        %v245 = vadd.f32 %v219, %v243
        %v246 = vxor.u32 %v245, 2147483648
        %v247 = vmul.f32 %v246, 1.442695
        %v248 = vpow.pop %v247
        %v249 = vadd.f32 %v248, 1.0
        %v250 = vrcp.pop %v249
        %v251 = vmul.f32 %v249, %v250
        %v252 = vsub.f32 1.0, %v251
        %v253 = vmul.f32 %v250, %v252
        %v254 = vadd.f32 %v250, %v253
        %vm255 = vweird.f32 %v249
        %vm256 = vweird.f32 %v250
        %vm257 = vmor %vm255, %vm256
        %v258 = vsel %vm257, %v250, %v254
        %v259 = vand.u32 2147483647, %v249
        %vm260 = vcmp.eq.f32.partialorder %v259, 8.507059e+37
        %v261 = vand.u32 %v249, 2147483648
        %v262 = vor.u32 1.1754944e-38, %v261
        %v263 = vsel %vm260, %v262, %v258
        %v264 = vmul.f32 1.0, %v263
        %v265 = vtanh.pop %v245
        %v266 = vmul.f32 %v264, 0.0
        %268 = vrot.lane.b32.xlu0 %v265, 64
        %v269 = vpop.permute.xlu0 %268
        %v271 = vmul.f32 %v264, %v269
        %273 = vrot.lane.b32.xlu0 %v271, 32
        %v274 = vpop.permute.xlu0 %273
        %v276 = vadd.f32 %v266, %v274
        %v277 = vtanh.pop %v276
        %279 = vrot.lane.b32.xlu0 %v277, 64
        %v280 = vpop.permute.xlu0 %279
        %v282 = vmul.f32 %v264, %v280
        %284 = vrot.lane.b32.xlu0 %v282, 32
        %v285 = vpop.permute.xlu0 %284
        %vm287 = vcmask 122880
        %288 = vst.msk [vmem:[#allocation2] sm:$0x1] %vm287, %v285
        %vm289 = vcmask 254080
        %290 = vst.msk [vmem:[#allocation2 + $0x7] sm:$0x1] %vm289, %v285
        %v291 = vsel %vm221, %v285, 0
        %293 = vmatpush.msra.mxu0 0.0
        %294 = vmatpush.msra.mxu0 0.0
        %295 = vmatpush.msra.mxu0 0.0
        %296 = vmatpush.msra.mxu0 0.0
        %297 = vmatpush.msra.mxu0 0.0
        %298 = vmatpush.msra.mxu0 0.0
        %299 = vmatpush.msra.mxu0 0.0
        %300 = vmatpush.msra.mxu0 0.0
        %301 = vmatpush.msra.mxu0 0.0
        %302 = vmatpush.msra.mxu0 0.0
        %303 = vmatpush.msra.mxu0 0.0
        %304 = vmatpush.msra.mxu0 0.0
        %305 = vmatpush.msra.mxu0 %v189
        %306 = vmatpush.msra.mxu0 %v188
        %307 = vmatpush.msra.mxu0 %v187
        %308 = vmatpush.msra.mxu0 %v186
        %309 = vmatmul.f32.gmra.mxu0 %v291
        %v310 = vpop.f32.mrf.mxu0
        %v311 = vadd.f32 0.0, %v310
        %312 = vdwg.mxu0
        %v314 = vrot.slane %v311, 7
        %v316 = vadd.f32 %v219, %v314
        %v317 = vxor.u32 %v316, 2147483648
        %v318 = vmul.f32 %v317, 1.442695
        %v319 = vpow.pop %v318
        %v320 = vadd.f32 %v319, 1.0
        %v321 = vrcp.pop %v320
        %v322 = vmul.f32 %v320, %v321
        %v323 = vsub.f32 1.0, %v322
        %v324 = vmul.f32 %v321, %v323
        %v325 = vadd.f32 %v321, %v324
        %vm326 = vweird.f32 %v320
        %vm327 = vweird.f32 %v321
        %vm328 = vmor %vm326, %vm327
        %v329 = vsel %vm328, %v321, %v325
        %v330 = vand.u32 2147483647, %v320
        %vm331 = vcmp.eq.f32.partialorder %v330, 8.507059e+37
        %v332 = vand.u32 %v320, 2147483648
        %v333 = vor.u32 1.1754944e-38, %v332
        %v334 = vsel %vm331, %v333, %v329
        %v335 = vmul.f32 1.0, %v334
        %v336 = vtanh.pop %v316
        %v338 = vrot.slane %v276, 7
        %v340 = vmul.f32 %v335, %v338
        %342 = vrot.lane.b32.xlu0 %v336, 64
        %v343 = vpop.permute.xlu0 %342
        %v345 = vmul.f32 %v335, %v343
        %347 = vrot.lane.b32.xlu0 %v345, 32
        %v348 = vpop.permute.xlu0 %347
        %v350 = vadd.f32 %v340, %v348
        %v351 = vtanh.pop %v350
        %353 = vrot.lane.b32.xlu0 %v351, 64
        %v354 = vpop.permute.xlu0 %353
        %v356 = vmul.f32 %v335, %v354
        %358 = vrot.lane.b32.xlu0 %v356, 32
        %v359 = vpop.permute.xlu0 %358
        %vm361 = vcmask 123905
        %362 = vst.msk [vmem:[#allocation2] sm:$0x2] %vm361, %v359
        %vm363 = vcmask 255105
        %364 = vst.msk [vmem:[#allocation2 + $0x5] sm:$0x2] %vm363, %v359
        %v365 = vrot.slane %v356, 1
        %366 = vrot.lane.b32.xlu0 %v365, 32
        %v367 = vpop.permute.xlu0 %366
        %v368 = vsel %vm221, %v367, 0
        %370 = vmatpush.msra.mxu0 0.0
        %371 = vmatpush.msra.mxu0 0.0
        %372 = vmatpush.msra.mxu0 0.0
        %373 = vmatpush.msra.mxu0 0.0
        %374 = vmatpush.msra.mxu0 0.0
        %375 = vmatpush.msra.mxu0 0.0
        %376 = vmatpush.msra.mxu0 0.0
        %377 = vmatpush.msra.mxu0 0.0
        %378 = vmatpush.msra.mxu0 0.0
        %379 = vmatpush.msra.mxu0 0.0
        %380 = vmatpush.msra.mxu0 0.0
        %381 = vmatpush.msra.mxu0 0.0
        %382 = vmatpush.msra.mxu0 %v189
        %383 = vmatpush.msra.mxu0 %v188
        %384 = vmatpush.msra.mxu0 %v187
        %385 = vmatpush.msra.mxu0 %v186
        %386 = vmatmul.f32.gmra.mxu0 %v368
        %v387 = vpop.f32.mrf.mxu0
        %v388 = vadd.f32 0.0, %v387
        %389 = vdwg.mxu0
        %v391 = vrot.slane %v388, 6
        %v393 = vadd.f32 %v219, %v391
        %v394 = vxor.u32 %v393, 2147483648
        %v395 = vmul.f32 %v394, 1.442695
        %v396 = vpow.pop %v395
        %v397 = vadd.f32 %v396, 1.0
        %v398 = vrcp.pop %v397
        %v399 = vmul.f32 %v397, %v398
        %v400 = vsub.f32 1.0, %v399
        %v401 = vmul.f32 %v398, %v400
        %v402 = vadd.f32 %v398, %v401
        %vm403 = vweird.f32 %v397
        %vm404 = vweird.f32 %v398
        %vm405 = vmor %vm403, %vm404
        %v406 = vsel %vm405, %v398, %v402
        %v407 = vand.u32 2147483647, %v397
        %vm408 = vcmp.eq.f32.partialorder %v407, 8.507059e+37
        %v409 = vand.u32 %v397, 2147483648
        %v410 = vor.u32 1.1754944e-38, %v409
        %v411 = vsel %vm408, %v410, %v406
        %v412 = vmul.f32 1.0, %v411
        %v413 = vtanh.pop %v393
        %v415 = vrot.slane %v350, 7
        %v417 = vmul.f32 %v412, %v415
        %419 = vrot.lane.b32.xlu0 %v413, 64
        %v420 = vpop.permute.xlu0 %419
        %v422 = vmul.f32 %v412, %v420
        %424 = vrot.lane.b32.xlu0 %v422, 32
        %v425 = vpop.permute.xlu0 %424
        %v427 = vadd.f32 %v417, %v425
        %v428 = vtanh.pop %v427
        %430 = vrot.lane.b32.xlu0 %v428, 64
        %v431 = vpop.permute.xlu0 %430
        %v433 = vmul.f32 %v412, %v431
        %435 = vrot.lane.b32.xlu0 %v433, 32
        %v436 = vpop.permute.xlu0 %435
        %vm438 = vcmask 124930
        %439 = vst.msk [vmem:[#allocation2] sm:$0x4] %vm438, %v436
        %vm440 = vcmask 256130
        %441 = vst.msk [vmem:[#allocation2 + $0x3] sm:$0x4] %vm440, %v436
        %v442 = vrot.slane %v433, 2
        %443 = vrot.lane.b32.xlu0 %v442, 32
        %v444 = vpop.permute.xlu0 %443
        %v445 = vsel %vm221, %v444, 0
        %447 = vmatpush.msra.mxu0 0.0
        %448 = vmatpush.msra.mxu0 0.0
        %449 = vmatpush.msra.mxu0 0.0
        %450 = vmatpush.msra.mxu0 0.0
        %451 = vmatpush.msra.mxu0 0.0
        %452 = vmatpush.msra.mxu0 0.0
        %453 = vmatpush.msra.mxu0 0.0
        %454 = vmatpush.msra.mxu0 0.0
        %455 = vmatpush.msra.mxu0 0.0
        %456 = vmatpush.msra.mxu0 0.0
        %457 = vmatpush.msra.mxu0 0.0
        %458 = vmatpush.msra.mxu0 0.0
        %459 = vmatpush.msra.mxu0 %v189
        %460 = vmatpush.msra.mxu0 %v188
        %461 = vmatpush.msra.mxu0 %v187
        %462 = vmatpush.msra.mxu0 %v186
        %463 = vmatmul.f32.gmra.mxu0 %v445
        %v464 = vpop.f32.mrf.mxu0
        %v465 = vadd.f32 0.0, %v464
        %466 = vdwg.mxu0
        %v468 = vrot.slane %v465, 5
        %v470 = vadd.f32 %v219, %v468
        %v471 = vxor.u32 %v470, 2147483648
        %v472 = vmul.f32 %v471, 1.442695
        %v473 = vpow.pop %v472
        %v474 = vadd.f32 %v473, 1.0
        %v475 = vrcp.pop %v474
        %v476 = vmul.f32 %v474, %v475
        %v477 = vsub.f32 1.0, %v476
        %v478 = vmul.f32 %v475, %v477
        %v479 = vadd.f32 %v475, %v478
        %vm480 = vweird.f32 %v474
        %vm481 = vweird.f32 %v475
        %vm482 = vmor %vm480, %vm481
        %v483 = vsel %vm482, %v475, %v479
        %v484 = vand.u32 2147483647, %v474
        %vm485 = vcmp.eq.f32.partialorder %v484, 8.507059e+37
        %v486 = vand.u32 %v474, 2147483648
        %v487 = vor.u32 1.1754944e-38, %v486
        %v488 = vsel %vm485, %v487, %v483
        %v489 = vmul.f32 1.0, %v488
        %v490 = vtanh.pop %v470
        %v492 = vrot.slane %v427, 7
        %v494 = vmul.f32 %v489, %v492
        %496 = vrot.lane.b32.xlu0 %v490, 64
        %v497 = vpop.permute.xlu0 %496
        %v499 = vmul.f32 %v489, %v497
        %501 = vrot.lane.b32.xlu0 %v499, 32
        %v502 = vpop.permute.xlu0 %501
        %v504 = vadd.f32 %v494, %v502
        %v505 = vtanh.pop %v504
        %507 = vrot.lane.b32.xlu0 %v505, 64
        %v508 = vpop.permute.xlu0 %507
        %v510 = vmul.f32 %v489, %v508
        %512 = vrot.lane.b32.xlu0 %v510, 32
        %v513 = vpop.permute.xlu0 %512
        %vm515 = vcmask 125955
        %516 = vst.msk [vmem:[#allocation2] sm:$0x8] %vm515, %v513
        %vm517 = vcmask 257155
        %518 = vst.msk [vmem:[#allocation2 + $0x1] sm:$0x8] %vm517, %v513
        %v519 = vrot.slane %v510, 3
        %520 = vrot.lane.b32.xlu0 %v519, 32
        %v521 = vpop.permute.xlu0 %520
        %v522 = vsel %vm221, %v521, 0
        %524 = vmatpush.msra.mxu0 0.0
        %525 = vmatpush.msra.mxu0 0.0
        %526 = vmatpush.msra.mxu0 0.0
        %527 = vmatpush.msra.mxu0 0.0
        %528 = vmatpush.msra.mxu0 0.0
        %529 = vmatpush.msra.mxu0 0.0
        %530 = vmatpush.msra.mxu0 0.0
        %531 = vmatpush.msra.mxu0 0.0
        %532 = vmatpush.msra.mxu0 0.0
        %533 = vmatpush.msra.mxu0 0.0
        %534 = vmatpush.msra.mxu0 0.0
        %535 = vmatpush.msra.mxu0 0.0
        %536 = vmatpush.msra.mxu0 %v189
        %537 = vmatpush.msra.mxu0 %v188
        %538 = vmatpush.msra.mxu0 %v187
        %539 = vmatpush.msra.mxu0 %v186
        %540 = vmatmul.f32.gmra.mxu0 %v522
        %v541 = vpop.f32.mrf.mxu0
        %v542 = vadd.f32 0.0, %v541
        %543 = vdwg.mxu0
        %v545 = vrot.slane %v542, 4
        %v547 = vadd.f32 %v219, %v545
        %v548 = vxor.u32 %v547, 2147483648
        %v549 = vmul.f32 %v548, 1.442695
        %v550 = vpow.pop %v549
        %v551 = vadd.f32 %v550, 1.0
        %v552 = vrcp.pop %v551
        %v553 = vmul.f32 %v551, %v552
        %v554 = vsub.f32 1.0, %v553
        %v555 = vmul.f32 %v552, %v554
        %v556 = vadd.f32 %v552, %v555
        %vm557 = vweird.f32 %v551
        %vm558 = vweird.f32 %v552
        %vm559 = vmor %vm557, %vm558
        %v560 = vsel %vm559, %v552, %v556
        %v561 = vand.u32 2147483647, %v551
        %vm562 = vcmp.eq.f32.partialorder %v561, 8.507059e+37
        %v563 = vand.u32 %v551, 2147483648
        %v564 = vor.u32 1.1754944e-38, %v563
        %v565 = vsel %vm562, %v564, %v560
        %v566 = vmul.f32 1.0, %v565
        %v567 = vtanh.pop %v547
        %v569 = vrot.slane %v504, 7
        %v571 = vmul.f32 %v566, %v569
        %573 = vrot.lane.b32.xlu0 %v567, 64
        %v574 = vpop.permute.xlu0 %573
        %v576 = vmul.f32 %v566, %v574
        %578 = vrot.lane.b32.xlu0 %v576, 32
        %v579 = vpop.permute.xlu0 %578
        %v581 = vadd.f32 %v571, %v579
        %v582 = vtanh.pop %v581
        %584 = vrot.lane.b32.xlu0 %v582, 64
        %v585 = vpop.permute.xlu0 %584
        %v587 = vmul.f32 %v566, %v585
        %589 = vrot.lane.b32.xlu0 %v587, 32
        %v590 = vpop.permute.xlu0 %589
        %vm592 = vcmask 126980
        %593 = vst.msk [vmem:[#allocation2] sm:$0x10] %vm592, %v590
        %vm594 = vcmask 258180
        %595 = vst.msk [vmem:[#allocation2 - $0x1] sm:$0x10] %vm594, %v590
        %v596 = vrot.slane %v587, 4
        %597 = vrot.lane.b32.xlu0 %v596, 32
        %v598 = vpop.permute.xlu0 %597
        %v599 = vsel %vm221, %v598, 0
        %601 = vmatpush.msra.mxu0 0.0
        %602 = vmatpush.msra.mxu0 0.0
        %603 = vmatpush.msra.mxu0 0.0
        %604 = vmatpush.msra.mxu0 0.0
        %605 = vmatpush.msra.mxu0 0.0
        %606 = vmatpush.msra.mxu0 0.0
        %607 = vmatpush.msra.mxu0 0.0
        %608 = vmatpush.msra.mxu0 0.0
        %609 = vmatpush.msra.mxu0 0.0
        %610 = vmatpush.msra.mxu0 0.0
        %611 = vmatpush.msra.mxu0 0.0
        %612 = vmatpush.msra.mxu0 0.0
        %613 = vmatpush.msra.mxu0 %v189
        %614 = vmatpush.msra.mxu0 %v188
        %615 = vmatpush.msra.mxu0 %v187
        %616 = vmatpush.msra.mxu0 %v186
        %617 = vmatmul.f32.gmra.mxu0 %v599
        %v618 = vpop.f32.mrf.mxu0
        %v619 = vadd.f32 0.0, %v618
        %620 = vdwg.mxu0
        %v622 = vrot.slane %v619, 3
        %v624 = vadd.f32 %v219, %v622
        %v625 = vxor.u32 %v624, 2147483648
        %v626 = vmul.f32 %v625, 1.442695
        %v627 = vpow.pop %v626
        %v628 = vadd.f32 %v627, 1.0
        %v629 = vrcp.pop %v628
        %v630 = vmul.f32 %v628, %v629
        %v631 = vsub.f32 1.0, %v630
        %v632 = vmul.f32 %v629, %v631
        %v633 = vadd.f32 %v629, %v632
        %vm634 = vweird.f32 %v628
        %vm635 = vweird.f32 %v629
        %vm636 = vmor %vm634, %vm635
        %v637 = vsel %vm636, %v629, %v633
        %v638 = vand.u32 2147483647, %v628
        %vm639 = vcmp.eq.f32.partialorder %v638, 8.507059e+37
        %v640 = vand.u32 %v628, 2147483648
        %v641 = vor.u32 1.1754944e-38, %v640
        %v642 = vsel %vm639, %v641, %v637
        %v643 = vmul.f32 1.0, %v642
        %v644 = vtanh.pop %v624
        %v646 = vrot.slane %v581, 7
        %v648 = vmul.f32 %v643, %v646
        %650 = vrot.lane.b32.xlu0 %v644, 64
        %v651 = vpop.permute.xlu0 %650
        %v653 = vmul.f32 %v643, %v651
        %655 = vrot.lane.b32.xlu0 %v653, 32
        %v656 = vpop.permute.xlu0 %655
        %v658 = vadd.f32 %v648, %v656
        %v659 = vtanh.pop %v658
        %661 = vrot.lane.b32.xlu0 %v659, 64
        %v662 = vpop.permute.xlu0 %661
        %v664 = vmul.f32 %v643, %v662
        %666 = vrot.lane.b32.xlu0 %v664, 32
        %v667 = vpop.permute.xlu0 %666
        %vm669 = vcmask 128005
        %670 = vst.msk [vmem:[#allocation2] sm:$0x20] %vm669, %v667
        %vm671 = vcmask 259205
        %672 = vst.msk [vmem:[#allocation2 - $0x3] sm:$0x20] %vm671, %v667
        %v673 = vrot.slane %v664, 5
        %674 = vrot.lane.b32.xlu0 %v673, 32
        %v675 = vpop.permute.xlu0 %674
        %v676 = vsel %vm221, %v675, 0
        %678 = vmatpush.msra.mxu0 0.0
        %679 = vmatpush.msra.mxu0 0.0
        %680 = vmatpush.msra.mxu0 0.0
        %681 = vmatpush.msra.mxu0 0.0
        %682 = vmatpush.msra.mxu0 0.0
        %683 = vmatpush.msra.mxu0 0.0
        %684 = vmatpush.msra.mxu0 0.0
        %685 = vmatpush.msra.mxu0 0.0
        %686 = vmatpush.msra.mxu0 0.0
        %687 = vmatpush.msra.mxu0 0.0
        %688 = vmatpush.msra.mxu0 0.0
        %689 = vmatpush.msra.mxu0 0.0
        %690 = vmatpush.msra.mxu0 %v189
        %691 = vmatpush.msra.mxu0 %v188
        %692 = vmatpush.msra.mxu0 %v187
        %693 = vmatpush.msra.mxu0 %v186
        %694 = vmatmul.f32.gmra.mxu0 %v676
        %v695 = vpop.f32.mrf.mxu0
        %v696 = vadd.f32 0.0, %v695
        %697 = vdwg.mxu0
        %v699 = vrot.slane %v696, 2
        %v701 = vadd.f32 %v219, %v699
        %v702 = vxor.u32 %v701, 2147483648
        %v703 = vmul.f32 %v702, 1.442695
        %v704 = vpow.pop %v703
        %v705 = vadd.f32 %v704, 1.0
        %v706 = vrcp.pop %v705
        %v707 = vmul.f32 %v705, %v706
        %v708 = vsub.f32 1.0, %v707
        %v709 = vmul.f32 %v706, %v708
        %v710 = vadd.f32 %v706, %v709
        %vm711 = vweird.f32 %v705
        %vm712 = vweird.f32 %v706
        %vm713 = vmor %vm711, %vm712
        %v714 = vsel %vm713, %v706, %v710
        %v715 = vand.u32 2147483647, %v705
        %vm716 = vcmp.eq.f32.partialorder %v715, 8.507059e+37
        %v717 = vand.u32 %v705, 2147483648
        %v718 = vor.u32 1.1754944e-38, %v717
        %v719 = vsel %vm716, %v718, %v714
        %v720 = vmul.f32 1.0, %v719
        %v721 = vtanh.pop %v701
        %v723 = vrot.slane %v658, 7
        %v725 = vmul.f32 %v720, %v723
        %727 = vrot.lane.b32.xlu0 %v721, 64
        %v728 = vpop.permute.xlu0 %727
        %v730 = vmul.f32 %v720, %v728
        %732 = vrot.lane.b32.xlu0 %v730, 32
        %v733 = vpop.permute.xlu0 %732
        %v735 = vadd.f32 %v725, %v733
        %v736 = vtanh.pop %v735
        %738 = vrot.lane.b32.xlu0 %v736, 64
        %v739 = vpop.permute.xlu0 %738
        %v741 = vmul.f32 %v720, %v739
        %743 = vrot.lane.b32.xlu0 %v741, 32
        %v744 = vpop.permute.xlu0 %743
        %vm746 = vcmask 129030
        %747 = vst.msk [vmem:[#allocation2] sm:$0x40] %vm746, %v744
        %vm748 = vcmask 260230
        %749 = vst.msk [vmem:[#allocation2 - $0x5] sm:$0x40] %vm748, %v744
        %v750 = vrot.slane %v741, 6
        %751 = vrot.lane.b32.xlu0 %v750, 32
        %v752 = vpop.permute.xlu0 %751
        %v753 = vsel %vm221, %v752, 0
        %755 = vmatpush.msra.mxu0 0.0
        %756 = vmatpush.msra.mxu0 0.0
        %757 = vmatpush.msra.mxu0 0.0
        %758 = vmatpush.msra.mxu0 0.0
        %759 = vmatpush.msra.mxu0 0.0
        %760 = vmatpush.msra.mxu0 0.0
        %761 = vmatpush.msra.mxu0 0.0
        %762 = vmatpush.msra.mxu0 0.0
        %763 = vmatpush.msra.mxu0 0.0
        %764 = vmatpush.msra.mxu0 0.0
        %765 = vmatpush.msra.mxu0 0.0
        %766 = vmatpush.msra.mxu0 0.0
        %767 = vmatpush.msra.mxu0 %v189
        %768 = vmatpush.msra.mxu0 %v188
        %769 = vmatpush.msra.mxu0 %v187
        %770 = vmatpush.msra.mxu0 %v186
        %771 = vmatmul.f32.gmra.mxu0 %v753
        %v772 = vpop.f32.mrf.mxu0
        %v773 = vadd.f32 0.0, %v772
        %774 = vdwg.mxu0
        %v776 = vrot.slane %v773, 1
        %v778 = vadd.f32 %v219, %v776
        %v779 = vxor.u32 %v778, 2147483648
        %v780 = vmul.f32 %v779, 1.442695
        %v781 = vpow.pop %v780
        %v782 = vadd.f32 %v781, 1.0
        %v783 = vrcp.pop %v782
        %v784 = vmul.f32 %v782, %v783
        %v785 = vsub.f32 1.0, %v784
        %v786 = vmul.f32 %v783, %v785
        %v787 = vadd.f32 %v783, %v786
        %vm788 = vweird.f32 %v782
        %vm789 = vweird.f32 %v783
        %vm790 = vmor %vm788, %vm789
        %v791 = vsel %vm790, %v783, %v787
        %v792 = vand.u32 2147483647, %v782
        %vm793 = vcmp.eq.f32.partialorder %v792, 8.507059e+37
        %v794 = vand.u32 %v782, 2147483648
        %v795 = vor.u32 1.1754944e-38, %v794
        %v796 = vsel %vm793, %v795, %v791
        %v797 = vmul.f32 1.0, %v796
        %v798 = vtanh.pop %v778
        %v800 = vrot.slane %v735, 7
        %v802 = vmul.f32 %v797, %v800
        %804 = vrot.lane.b32.xlu0 %v798, 64
        %v805 = vpop.permute.xlu0 %804
        %v807 = vmul.f32 %v797, %v805
        %809 = vrot.lane.b32.xlu0 %v807, 32
        %v810 = vpop.permute.xlu0 %809
        %v812 = vadd.f32 %v802, %v810
        %v813 = vtanh.pop %v812
        %815 = vrot.lane.b32.xlu0 %v813, 64
        %v816 = vpop.permute.xlu0 %815
        %v818 = vmul.f32 %v797, %v816
        %820 = vrot.lane.b32.xlu0 %v818, 32
        %v821 = vpop.permute.xlu0 %820
        %vm823 = vcmask 130055
        %824 = vst.msk [vmem:[#allocation2] sm:$0x80] %vm823, %v821
        %vm825 = vcmask 261255
        %826 = vst.msk [vmem:[#allocation2 - $0x7] sm:$0x80] %vm825, %v821
        %v827 = vld [vmem:[#allocation2] sm:$0xff]
        %v828 = vperm.slane %v194, 1
        %v830 = vsel %vm221, %v827, 0
        %832 = vmatpush.msra.mxu0 0.0
        %833 = vmatpush.msra.mxu0 0.0
        %834 = vmatpush.msra.mxu0 0.0
        %835 = vmatpush.msra.mxu0 0.0
        %836 = vmatpush.msra.mxu0 0.0
        %837 = vmatpush.msra.mxu0 0.0
        %838 = vmatpush.msra.mxu0 0.0
        %839 = vmatpush.msra.mxu0 0.0
        %840 = vmatpush.msra.mxu0 0.0
        %841 = vmatpush.msra.mxu0 0.0
        %842 = vmatpush.msra.mxu0 0.0
        %843 = vmatpush.msra.mxu0 0.0
        %844 = vmatpush.msra.mxu0 %v193
        %845 = vmatpush.msra.mxu0 %v192
        %846 = vmatpush.msra.mxu0 %v191
        %847 = vmatpush.msra.mxu0 %v190
        %848 = vmatmul.f32.gmra.mxu0 %v830
        %v849 = vpop.f32.mrf.mxu0
        %v850 = vadd.f32 %v828, %v849
        %851 = vdwg.mxu0
        %v852 = vperm.slane %v194, 2
        %v853 = vadd.f32 %v850, %v852
        %855 = vrot.lane.b32.xlu0 %v853, 127
        %v856 = vpop.permute.xlu0 %855
        %v858 = vmax.f32 %v853, %v856
        %860 = vrot.lane.b32.xlu0 %v858, 2
        %v861 = vpop.permute.xlu0 %860
        %vm863 = vcmp.gt.f32.partialorder %v853, %v861
        %864 = vrot.lane.b32.xlu0 %v853, 1
        %v865 = vpop.permute.xlu0 %864
        %vm867 = vcmp.gt.f32.partialorder %v853, %v865
        %v868 = vsel %vm867, 1.0, 0.0
        %870 = vrot.lane.b32.xlu0 %v868, 1
        %v871 = vpop.permute.xlu0 %870
        %v873 = vsel %vm863, 2.0, %v871
        %v874 = vlaneseq
        %v875 = vand.u32 %v874, 127
        %vm876 = vcmp.eq.s32.totalorder %v875, 3
        %878 = vset.pattern.permute.xlu0 2
        %879 = vperm.xlu0 %878, %v873
        %v880 = vpop.permute.xlu0 %879
        %v882 = vsel %vm876, %v880, %v850
        %883 = vst [vmem:[%s177] sm:$0xff] %v882
        %s884 = sand.u32 %s75, 1
        %s885 = scalar_lea.sflag [#allocation5], %s884
        %s886 = sand.u32 %s75, 1
        %s887 = smul.addr %s886, 8
        %s888 = scalar_lea.vmem [#allocation8], %s887
        // Predicated region
        $region37: #{tpu_custom_call.1} parent=27 // pred_check
          %p889 = pneg %p85
        $region38: #{tpu_custom_call.1} parent=27 // pred_check_branch
          %891 = sbr.rel (%p889) target = $region40
        $region39: #{tpu_custom_call.1} parent=27 // pred_region
          %893 = vsyncadd %s885, 0
          %s894 = smul.addr %s20, 8
          %s895 = scalar_lea.hbm %s2, %s894
          %s897 = sshll.u32 %s888, 4
          %s898 = int_to_ptr.vmem [resolvable:$true] %s897
          %s899 = sshll.u32 %s895, 4
          %s900 = int_to_ptr.hbm [resolvable:$true] %s899
          %902 = dma.vmem_to_hbm [thread:$0]  %s898, 128, %s900, %s885
        $region40: #{tpu_custom_call.1} parent=27 // pred_fallthru
          _
      $region28: #{tpu_custom_call.1} parent=5 // pred_fallthru
        _
      %p903 = scmp.le.s32.totalorder 2, %s15
      // Predicated region
      $region41: #{tpu_custom_call.1} parent=5 // pred_check
        %p904 = pneg %p903
      $region42: #{tpu_custom_call.1} parent=5 // pred_check_branch
        %906 = sbr.rel (%p904) target = $region44
      $region43: #{tpu_custom_call.1} parent=5 // pred_region
        %s907 = ssub.s32 %s15, 2
        // Predicated region
        $region45: #{tpu_custom_call.1} parent=43 // pred_check
          %p908 = pneg %p91
        $region46: #{tpu_custom_call.1} parent=43 // pred_check_branch
          %910 = sbr.rel (%p908) target = $region48
        $region47: #{tpu_custom_call.1} parent=43 // pred_region
          %s911 = sand.u32 %s76, 1
          %s912 = scalar_lea.sflag [#allocation5], %s911
          %s913 = sand.u32 %s76, 1
          %s914 = smul.addr %s913, 8
          %s915 = scalar_lea.vmem [#allocation8], %s914
          %917 = dma.done %s912, 128
        $region48: #{tpu_custom_call.1} parent=43 // pred_fallthru
          _
      $region44: #{tpu_custom_call.1} parent=5 // pred_fallthru
        _
    $region6: #{tpu_custom_call.1} parent=1 // loop_footer
      %s19 = sadd.s32 1, %s15
    $region7: #{tpu_custom_call.1} parent=1 // loop_footer_branch
      %14 = sbr.rel target = $region3
    $region8: #{tpu_custom_call.1} parent=1 // loop_exit
      _
    %918 = vsyncpa [#allocation4], 1
    %s919 = scalar_lea.sflag [#allocation4], 1
    %920 = vsyncpa %s919, 1
    %921 = vsyncpa [#allocation7], 1
    %922 = vsyncpa [#allocation5], 1
    %s923 = scalar_lea.sflag [#allocation5], 1
    %924 = vsyncpa %s923, 1

</llo_original>
